<compile_context>
chip_gen: v6e
topology: v6e:2x2x1
jax: 0.10.0
libtpu: 0.0.40
codegen_flags: <defaults>
</compile_context>

<pallas_src>
import numpy as np
import jax
import jax.numpy as jnp
from jax.experimental import pallas as pl
from jax.experimental.pallas import tpu as pltpu


# ----------------------------- schedule (host-side, numpy float64 like torch) ---
def cosine_beta_schedule(timesteps, s=0.008):
    steps = timesteps + 1
    x = np.linspace(0, timesteps, steps, dtype=np.float64)
    alphas_cumprod = np.cos((x / timesteps + s) / (1 + s) * np.pi * 0.5) ** 2
    alphas_cumprod = alphas_cumprod / alphas_cumprod[0]
    betas = 1 - alphas_cumprod[1:] / alphas_cumprod[:-1]
    return np.clip(betas, 0, 0.999)


# ----------------------------------------------------------------- Pallas kernel
def make_p_losses_kernel(B, C, HW):
    inv_total = np.float32(1.0 / (B * C * HW))

    def p_losses_kernel(t_ref, sac_ref, somac_ref, x_ref, n_ref, add_ref, w_ref,
                        loss_ref):
        total = jnp.float32(0.0)
        for b in range(B):                        # B=2: static unroll, traced once
            tb = t_ref[b]                         # SMEM scalar read
            sac = sac_ref[tb]                     # in-kernel extract() gather (SMEM)
            somac = somac_ref[tb]

            xb = x_ref[pl.ds(b * C, C), :]        # (C, HW) slice, natural layout
            nb = n_ref[pl.ds(b * C, C), :]

            # q_sample: per-batch scalar coefficients splat over the (C, HW) tile.
            x_t = sac * xb + somac * nb

            # Synthetic 1x1-conv denoiser as an unrolled VPU MAC.  C=8 would use
            # <4% of the MXU rows (pure fill/drain), so keep it on the VALU here;
            # at production C use an MXU dot with generation-appropriate tiling.
            y = jnp.broadcast_to(add_ref[:, b:b + 1], (C, HW))   # bias + time-emb
            for k in range(C):
                y = y + w_ref[:, k:k + 1] * x_t[k:k + 1, :]

            # L1 loss vs noise (objective='pred_noise', loss_type='l1').
            total = total + jnp.sum(jnp.abs(y - nb))

        # Lane-dense splat store; wrapper reads [0, 0].
        loss_ref[...] = jnp.broadcast_to(total * inv_total, (1, 128))

    return p_losses_kernel


# ----------------------------------------------------------------------- wrapper
def gaussian_diffusion_forward(img, t, noise, buffers, params):
    B, C, H, W = img.shape
    HW = H * W

    # Natural layout: (B, C, H, W) -> (B*C, HW) is a pure metadata reshape.
    # Lane/sublane density assumed; re-derive if B/C/H/W/dtype change.
    assert HW % 128 == 0 and (B * C) % 8 == 0, "layout assumes (8,128)-dense tiles"
    x = img.reshape(B * C, HW)
    n = noise.reshape(B * C, HW)

    # Tiny (C, B) combined bias + time-embedding; HW broadcast happens in-kernel.
    add_cb = params["bias"] + params["time_emb"][t].T          # (C, B)

    kernel = make_p_losses_kernel(B, C, HW)

    loss = pl.pallas_call(
        kernel,
        out_shape=jax.ShapeDtypeStruct((1, 128), jnp.float32),
        in_specs=[
            pl.BlockSpec(memory_space=pltpu.MemorySpace.SMEM),   # t            (B,)  i32
            pl.BlockSpec(memory_space=pltpu.MemorySpace.SMEM),   # sqrt(acp)    (T,)  f32
            pl.BlockSpec(memory_space=pltpu.MemorySpace.SMEM),   # sqrt(1-acp)  (T,)  f32
            pl.BlockSpec(memory_space=pltpu.MemorySpace.VMEM),   # x_start      (B*C, HW)
            pl.BlockSpec(memory_space=pltpu.MemorySpace.VMEM),   # noise        (B*C, HW)
            pl.BlockSpec(memory_space=pltpu.MemorySpace.VMEM),   # bias+t_emb   (C, B)
            pl.BlockSpec(memory_space=pltpu.MemorySpace.VMEM),   # conv weight  (C, C)
        ],
        out_specs=pl.BlockSpec(memory_space=pltpu.MemorySpace.VMEM),
    )(t,
      buffers["sqrt_alphas_cumprod"],
      buffers["sqrt_one_minus_alphas_cumprod"],
      x, n, add_cb, params["w"])
    return loss[0, 0]


# -------------------------------------------------- float64 numpy reference loss
def reference_loss_np(img, t, noise, buffers, params):
    B, C, H, W = img.shape
    img64 = np.asarray(img, np.float64)
    noise64 = np.asarray(noise, np.float64)
    t_np = np.asarray(t)
    sac = np.asarray(buffers["sqrt_alphas_cumprod"], np.float64)[t_np].reshape(B, 1, 1, 1)
    somac = np.asarray(buffers["sqrt_one_minus_alphas_cumprod"],
                       np.float64)[t_np].reshape(B, 1, 1, 1)
    x_t = sac * img64 + somac * noise64
    xf = x_t.reshape(B, C, H * W)
    w = np.asarray(params["w"], np.float64)
    y = np.einsum("ij,bjk->bik", w, xf)
    y = (y + np.asarray(params["bias"], np.float64)[None]
           + np.asarray(params["time_emb"], np.float64)[t_np][:, :, None])
    return np.mean(np.abs(y - noise64.reshape(B, C, H * W)))


if __name__ == "__main__":
    B, C, H, W = 2, 8, 16, 16          # batch, channels, image_size, image_size
    T = 1000                            # timesteps

    key = jax.random.PRNGKey(0)
    k1, k2, k3, k4, k5, k6 = jax.random.split(key, 6)

    img = jax.random.normal(k1, (B, C, H, W), jnp.float32)
    t = jax.random.randint(k2, (B,), 0, T)            # int32
    noise = jax.random.normal(k3, (B, C, H, W), jnp.float32)

    # diffusion buffers (cosine schedule, registered as float32 as in __init__)
    betas = cosine_beta_schedule(T)
    alphas = 1.0 - betas
    alphas_cumprod = np.cumprod(alphas, axis=0)
    buffers = {
        "sqrt_alphas_cumprod": jnp.asarray(np.sqrt(alphas_cumprod), jnp.float32),
        "sqrt_one_minus_alphas_cumprod": jnp.asarray(
            np.sqrt(1.0 - alphas_cumprod), jnp.float32),
    }

    # deterministic synthetic denoiser parameters
    params = {
        "w": jax.random.normal(k4, (C, C), jnp.float32) / np.sqrt(C),
        "bias": 0.1 * jax.random.normal(k5, (C, 1), jnp.float32),
        "time_emb": 0.01 * jax.random.normal(k6, (T, C), jnp.float32),
    }

    loss = gaussian_diffusion_forward(img, t, noise, buffers, params)
    jax.block_until_ready(loss)

    ref = reference_loss_np(img, t, noise, buffers, params)
    assert np.allclose(np.asarray(loss), ref, rtol=1e-4, atol=1e-6), (loss, ref)
    print("KERNEL_OK")
</pallas_src>

<mosaic_0001>
module attributes {stable_mosaic.version = 11 : i64} {
  func.func @p_losses_kernel(%arg0: memref<2xi32, #tpu.memory_space<smem>>, %arg1: memref<1000xf32, #tpu.memory_space<smem>>, %arg2: memref<1000xf32, #tpu.memory_space<smem>>, %arg3: memref<16x256xf32, #tpu.memory_space<vmem>>, %arg4: memref<16x256xf32, #tpu.memory_space<vmem>>, %arg5: memref<8x2xf32, #tpu.memory_space<vmem>>, %arg6: memref<8x8xf32, #tpu.memory_space<vmem>>, %arg7: memref<1x128xf32, #tpu.memory_space<vmem>>) attributes {dimension_semantics = [], scalar_prefetch = 0 : i64, scratch_operands = 0 : i64, tpu.core_type = #tpu.core_type<tc>} {
    %c0 = arith.constant 0 : index
    %0 = memref.load %arg0[%c0] : memref<2xi32, #tpu.memory_space<smem>>
    %1 = arith.index_cast %0 : i32 to index
    %2 = memref.load %arg1[%1] : memref<1000xf32, #tpu.memory_space<smem>>
    %3 = arith.index_cast %0 : i32 to index
    %4 = memref.load %arg2[%3] : memref<1000xf32, #tpu.memory_space<smem>>
    %c0_0 = arith.constant 0 : index
    %c0_1 = arith.constant 0 : index
    %5 = vector.load %arg3[%c0_0, %c0_1] : memref<16x256xf32, #tpu.memory_space<vmem>>, vector<8x256xf32>
    %c0_2 = arith.constant 0 : index
    %c0_3 = arith.constant 0 : index
    %6 = vector.load %arg4[%c0_2, %c0_3] : memref<16x256xf32, #tpu.memory_space<vmem>>, vector<8x256xf32>
    %7 = vector.broadcast %2 : f32 to vector<8x256xf32>
    %8 = arith.mulf %7, %5 : vector<8x256xf32>
    %9 = vector.broadcast %4 : f32 to vector<8x256xf32>
    %10 = arith.mulf %9, %6 : vector<8x256xf32>
    %11 = arith.addf %8, %10 : vector<8x256xf32>
    %c0_4 = arith.constant 0 : index
    %c0_5 = arith.constant 0 : index
    %12 = vector.load %arg5[%c0_4, %c0_5] : memref<8x2xf32, #tpu.memory_space<vmem>>, vector<8x1xf32>
    %13 = vector.shape_cast %12 : vector<8x1xf32> to vector<8x1xf32>
    %14 = vector.broadcast %13 : vector<8x1xf32> to vector<8x256xf32>
    %c0_6 = arith.constant 0 : index
    %c0_7 = arith.constant 0 : index
    %15 = vector.load %arg6[%c0_6, %c0_7] : memref<8x8xf32, #tpu.memory_space<vmem>>, vector<8x1xf32>
    %16 = vector.extract_strided_slice %11 {offsets = [0, 0], sizes = [1, 256], strides = [1, 1]} : vector<8x256xf32> to vector<1x256xf32>
    %17 = vector.broadcast %15 : vector<8x1xf32> to vector<8x256xf32>
    %18 = vector.broadcast %16 : vector<1x256xf32> to vector<8x256xf32>
    %19 = arith.mulf %17, %18 : vector<8x256xf32>
    %20 = arith.addf %14, %19 : vector<8x256xf32>
    %c0_8 = arith.constant 0 : index
    %c1 = arith.constant 1 : index
    %21 = vector.load %arg6[%c0_8, %c1] : memref<8x8xf32, #tpu.memory_space<vmem>>, vector<8x1xf32>
    %22 = vector.extract_strided_slice %11 {offsets = [1, 0], sizes = [1, 256], strides = [1, 1]} : vector<8x256xf32> to vector<1x256xf32>
    %23 = vector.broadcast %21 : vector<8x1xf32> to vector<8x256xf32>
    %24 = vector.broadcast %22 : vector<1x256xf32> to vector<8x256xf32>
    %25 = arith.mulf %23, %24 : vector<8x256xf32>
    %26 = arith.addf %20, %25 : vector<8x256xf32>
    %c0_9 = arith.constant 0 : index
    %c2 = arith.constant 2 : index
    %27 = vector.load %arg6[%c0_9, %c2] : memref<8x8xf32, #tpu.memory_space<vmem>>, vector<8x1xf32>
    %28 = vector.extract_strided_slice %11 {offsets = [2, 0], sizes = [1, 256], strides = [1, 1]} : vector<8x256xf32> to vector<1x256xf32>
    %29 = vector.broadcast %27 : vector<8x1xf32> to vector<8x256xf32>
    %30 = vector.broadcast %28 : vector<1x256xf32> to vector<8x256xf32>
    %31 = arith.mulf %29, %30 : vector<8x256xf32>
    %32 = arith.addf %26, %31 : vector<8x256xf32>
    %c0_10 = arith.constant 0 : index
    %c3 = arith.constant 3 : index
    %33 = vector.load %arg6[%c0_10, %c3] : memref<8x8xf32, #tpu.memory_space<vmem>>, vector<8x1xf32>
    %34 = vector.extract_strided_slice %11 {offsets = [3, 0], sizes = [1, 256], strides = [1, 1]} : vector<8x256xf32> to vector<1x256xf32>
    %35 = vector.broadcast %33 : vector<8x1xf32> to vector<8x256xf32>
    %36 = vector.broadcast %34 : vector<1x256xf32> to vector<8x256xf32>
    %37 = arith.mulf %35, %36 : vector<8x256xf32>
    %38 = arith.addf %32, %37 : vector<8x256xf32>
    %c0_11 = arith.constant 0 : index
    %c4 = arith.constant 4 : index
    %39 = vector.load %arg6[%c0_11, %c4] : memref<8x8xf32, #tpu.memory_space<vmem>>, vector<8x1xf32>
    %40 = vector.extract_strided_slice %11 {offsets = [4, 0], sizes = [1, 256], strides = [1, 1]} : vector<8x256xf32> to vector<1x256xf32>
    %41 = vector.broadcast %39 : vector<8x1xf32> to vector<8x256xf32>
    %42 = vector.broadcast %40 : vector<1x256xf32> to vector<8x256xf32>
    %43 = arith.mulf %41, %42 : vector<8x256xf32>
    %44 = arith.addf %38, %43 : vector<8x256xf32>
    %c0_12 = arith.constant 0 : index
    %c5 = arith.constant 5 : index
    %45 = vector.load %arg6[%c0_12, %c5] : memref<8x8xf32, #tpu.memory_space<vmem>>, vector<8x1xf32>
    %46 = vector.extract_strided_slice %11 {offsets = [5, 0], sizes = [1, 256], strides = [1, 1]} : vector<8x256xf32> to vector<1x256xf32>
    %47 = vector.broadcast %45 : vector<8x1xf32> to vector<8x256xf32>
    %48 = vector.broadcast %46 : vector<1x256xf32> to vector<8x256xf32>
    %49 = arith.mulf %47, %48 : vector<8x256xf32>
    %50 = arith.addf %44, %49 : vector<8x256xf32>
    %c0_13 = arith.constant 0 : index
    %c6 = arith.constant 6 : index
    %51 = vector.load %arg6[%c0_13, %c6] : memref<8x8xf32, #tpu.memory_space<vmem>>, vector<8x1xf32>
    %52 = vector.extract_strided_slice %11 {offsets = [6, 0], sizes = [1, 256], strides = [1, 1]} : vector<8x256xf32> to vector<1x256xf32>
    %53 = vector.broadcast %51 : vector<8x1xf32> to vector<8x256xf32>
    %54 = vector.broadcast %52 : vector<1x256xf32> to vector<8x256xf32>
    %55 = arith.mulf %53, %54 : vector<8x256xf32>
    %56 = arith.addf %50, %55 : vector<8x256xf32>
    %c0_14 = arith.constant 0 : index
    %c7 = arith.constant 7 : index
    %57 = vector.load %arg6[%c0_14, %c7] : memref<8x8xf32, #tpu.memory_space<vmem>>, vector<8x1xf32>
    %58 = vector.extract_strided_slice %11 {offsets = [7, 0], sizes = [1, 256], strides = [1, 1]} : vector<8x256xf32> to vector<1x256xf32>
    %59 = vector.broadcast %57 : vector<8x1xf32> to vector<8x256xf32>
    %60 = vector.broadcast %58 : vector<1x256xf32> to vector<8x256xf32>
    %61 = arith.mulf %59, %60 : vector<8x256xf32>
    %62 = arith.addf %56, %61 : vector<8x256xf32>
    %63 = arith.subf %62, %6 : vector<8x256xf32>
    %64 = math.absf %63 : vector<8x256xf32>
    %65 = vector.shape_cast %64 : vector<8x256xf32> to vector<1x8x256xf32>
    %cst = arith.constant dense<0.000000e+00> : vector<1xf32>
    %66 = vector.multi_reduction <add>, %65, %cst [1, 2] : vector<1x8x256xf32> to vector<1xf32>
    %67 = vector.shape_cast %66 : vector<1xf32> to vector<1x1x1xf32>
    %68 = vector.extract %67[0, 0, 0] : f32 from vector<1x1x1xf32>
    %cst_15 = arith.constant 0.000000e+00 : f32
    %69 = arith.addf %cst_15, %68 : f32
    %c1_16 = arith.constant 1 : index
    %70 = memref.load %arg0[%c1_16] : memref<2xi32, #tpu.memory_space<smem>>
    %71 = arith.index_cast %70 : i32 to index
    %72 = memref.load %arg1[%71] : memref<1000xf32, #tpu.memory_space<smem>>
    %73 = arith.index_cast %70 : i32 to index
    %74 = memref.load %arg2[%73] : memref<1000xf32, #tpu.memory_space<smem>>
    %c8 = arith.constant 8 : index
    %c0_17 = arith.constant 0 : index
    %75 = vector.load %arg3[%c8, %c0_17] : memref<16x256xf32, #tpu.memory_space<vmem>>, vector<8x256xf32>
    %c8_18 = arith.constant 8 : index
    %c0_19 = arith.constant 0 : index
    %76 = vector.load %arg4[%c8_18, %c0_19] : memref<16x256xf32, #tpu.memory_space<vmem>>, vector<8x256xf32>
    %77 = vector.broadcast %72 : f32 to vector<8x256xf32>
    %78 = arith.mulf %77, %75 : vector<8x256xf32>
    %79 = vector.broadcast %74 : f32 to vector<8x256xf32>
    %80 = arith.mulf %79, %76 : vector<8x256xf32>
    %81 = arith.addf %78, %80 : vector<8x256xf32>
    %c0_20 = arith.constant 0 : index
    %c1_21 = arith.constant 1 : index
    %82 = vector.load %arg5[%c0_20, %c1_21] : memref<8x2xf32, #tpu.memory_space<vmem>>, vector<8x1xf32>
    %83 = vector.shape_cast %82 : vector<8x1xf32> to vector<8x1xf32>
    %84 = vector.broadcast %83 : vector<8x1xf32> to vector<8x256xf32>
    %c0_22 = arith.constant 0 : index
    %c0_23 = arith.constant 0 : index
    %85 = vector.load %arg6[%c0_22, %c0_23] : memref<8x8xf32, #tpu.memory_space<vmem>>, vector<8x1xf32>
    %86 = vector.extract_strided_slice %81 {offsets = [0, 0], sizes = [1, 256], strides = [1, 1]} : vector<8x256xf32> to vector<1x256xf32>
    %87 = vector.broadcast %85 : vector<8x1xf32> to vector<8x256xf32>
    %88 = vector.broadcast %86 : vector<1x256xf32> to vector<8x256xf32>
    %89 = arith.mulf %87, %88 : vector<8x256xf32>
    %90 = arith.addf %84, %89 : vector<8x256xf32>
    %c0_24 = arith.constant 0 : index
    %c1_25 = arith.constant 1 : index
    %91 = vector.load %arg6[%c0_24, %c1_25] : memref<8x8xf32, #tpu.memory_space<vmem>>, vector<8x1xf32>
    %92 = vector.extract_strided_slice %81 {offsets = [1, 0], sizes = [1, 256], strides = [1, 1]} : vector<8x256xf32> to vector<1x256xf32>
    %93 = vector.broadcast %91 : vector<8x1xf32> to vector<8x256xf32>
    %94 = vector.broadcast %92 : vector<1x256xf32> to vector<8x256xf32>
    %95 = arith.mulf %93, %94 : vector<8x256xf32>
    %96 = arith.addf %90, %95 : vector<8x256xf32>
    %c0_26 = arith.constant 0 : index
    %c2_27 = arith.constant 2 : index
    %97 = vector.load %arg6[%c0_26, %c2_27] : memref<8x8xf32, #tpu.memory_space<vmem>>, vector<8x1xf32>
    %98 = vector.extract_strided_slice %81 {offsets = [2, 0], sizes = [1, 256], strides = [1, 1]} : vector<8x256xf32> to vector<1x256xf32>
    %99 = vector.broadcast %97 : vector<8x1xf32> to vector<8x256xf32>
    %100 = vector.broadcast %98 : vector<1x256xf32> to vector<8x256xf32>
    %101 = arith.mulf %99, %100 : vector<8x256xf32>
    %102 = arith.addf %96, %101 : vector<8x256xf32>
    %c0_28 = arith.constant 0 : index
    %c3_29 = arith.constant 3 : index
    %103 = vector.load %arg6[%c0_28, %c3_29] : memref<8x8xf32, #tpu.memory_space<vmem>>, vector<8x1xf32>
    %104 = vector.extract_strided_slice %81 {offsets = [3, 0], sizes = [1, 256], strides = [1, 1]} : vector<8x256xf32> to vector<1x256xf32>
    %105 = vector.broadcast %103 : vector<8x1xf32> to vector<8x256xf32>
    %106 = vector.broadcast %104 : vector<1x256xf32> to vector<8x256xf32>
    %107 = arith.mulf %105, %106 : vector<8x256xf32>
    %108 = arith.addf %102, %107 : vector<8x256xf32>
    %c0_30 = arith.constant 0 : index
    %c4_31 = arith.constant 4 : index
    %109 = vector.load %arg6[%c0_30, %c4_31] : memref<8x8xf32, #tpu.memory_space<vmem>>, vector<8x1xf32>
    %110 = vector.extract_strided_slice %81 {offsets = [4, 0], sizes = [1, 256], strides = [1, 1]} : vector<8x256xf32> to vector<1x256xf32>
    %111 = vector.broadcast %109 : vector<8x1xf32> to vector<8x256xf32>
    %112 = vector.broadcast %110 : vector<1x256xf32> to vector<8x256xf32>
    %113 = arith.mulf %111, %112 : vector<8x256xf32>
    %114 = arith.addf %108, %113 : vector<8x256xf32>
    %c0_32 = arith.constant 0 : index
    %c5_33 = arith.constant 5 : index
    %115 = vector.load %arg6[%c0_32, %c5_33] : memref<8x8xf32, #tpu.memory_space<vmem>>, vector<8x1xf32>
    %116 = vector.extract_strided_slice %81 {offsets = [5, 0], sizes = [1, 256], strides = [1, 1]} : vector<8x256xf32> to vector<1x256xf32>
    %117 = vector.broadcast %115 : vector<8x1xf32> to vector<8x256xf32>
    %118 = vector.broadcast %116 : vector<1x256xf32> to vector<8x256xf32>
    %119 = arith.mulf %117, %118 : vector<8x256xf32>
    %120 = arith.addf %114, %119 : vector<8x256xf32>
    %c0_34 = arith.constant 0 : index
    %c6_35 = arith.constant 6 : index
    %121 = vector.load %arg6[%c0_34, %c6_35] : memref<8x8xf32, #tpu.memory_space<vmem>>, vector<8x1xf32>
    %122 = vector.extract_strided_slice %81 {offsets = [6, 0], sizes = [1, 256], strides = [1, 1]} : vector<8x256xf32> to vector<1x256xf32>
    %123 = vector.broadcast %121 : vector<8x1xf32> to vector<8x256xf32>
    %124 = vector.broadcast %122 : vector<1x256xf32> to vector<8x256xf32>
    %125 = arith.mulf %123, %124 : vector<8x256xf32>
    %126 = arith.addf %120, %125 : vector<8x256xf32>
    %c0_36 = arith.constant 0 : index
    %c7_37 = arith.constant 7 : index
    %127 = vector.load %arg6[%c0_36, %c7_37] : memref<8x8xf32, #tpu.memory_space<vmem>>, vector<8x1xf32>
    %128 = vector.extract_strided_slice %81 {offsets = [7, 0], sizes = [1, 256], strides = [1, 1]} : vector<8x256xf32> to vector<1x256xf32>
    %129 = vector.broadcast %127 : vector<8x1xf32> to vector<8x256xf32>
    %130 = vector.broadcast %128 : vector<1x256xf32> to vector<8x256xf32>
    %131 = arith.mulf %129, %130 : vector<8x256xf32>
    %132 = arith.addf %126, %131 : vector<8x256xf32>
    %133 = arith.subf %132, %76 : vector<8x256xf32>
    %134 = math.absf %133 : vector<8x256xf32>
    %135 = vector.shape_cast %134 : vector<8x256xf32> to vector<1x8x256xf32>
    %cst_38 = arith.constant dense<0.000000e+00> : vector<1xf32>
    %136 = vector.multi_reduction <add>, %135, %cst_38 [1, 2] : vector<1x8x256xf32> to vector<1xf32>
    %137 = vector.shape_cast %136 : vector<1xf32> to vector<1x1x1xf32>
    %138 = vector.extract %137[0, 0, 0] : f32 from vector<1x1x1xf32>
    %139 = arith.addf %69, %138 : f32
    %cst_39 = arith.constant 2.44140625E-4 : f32
    %140 = arith.mulf %139, %cst_39 : f32
    %141 = vector.broadcast %140 : f32 to vector<1x128xf32>
    %c0_40 = arith.constant 0 : index
    %c0_41 = arith.constant 0 : index
    %142 = vector.load %arg7[%c0_40, %c0_41] : memref<1x128xf32, #tpu.memory_space<vmem>>, vector<1x128xf32>
    tpu.vector_store %arg7[%c0_40, %c0_41], %141 {strides = array<i32>} : memref<1x128xf32, #tpu.memory_space<vmem>>, vector<1x128xf32>,
    return
  }
}

</mosaic_0001>

<llo_original>
// kernel: tpu_custom_call.1
$region0: #{tpu_custom_call.1}
  #allocation0 [shape = 'u32[]', space=smem, size = 0x4, offset = 0x4, fixed_abs, tag = 'smem constant byte address 0x4 - core index']
  #allocation1 [shape = 'u32[144,128]{1,0:T(1,128)}', space=vmem, size = 0x12000, scoped, tag = 'internal scratch']
  %s0 = inlined_call_operand.vmem [shape: s32[2], index: 0, kind: input, shape index: {}]
  %s1 = inlined_call_operand.vmem [shape: f32[1000], index: 1, kind: input, shape index: {}]
  %s2 = inlined_call_operand.hbm [shape: f32[1000], index: 2, kind: input, shape index: {}]
  %s3 = inlined_call_operand.hbm [shape: f32[16,256], index: 3, kind: input, shape index: {}]
  %s4 = inlined_call_operand.hbm [shape: f32[16,256], index: 4, kind: input, shape index: {}]
  %s5 = inlined_call_operand.vmem [shape: f32[8,2], index: 5, kind: input, shape index: {}]
  %s6 = inlined_call_operand.vmem [shape: f32[8,8], index: 6, kind: input, shape index: {}]
  %s7 = inlined_call_operand.hbm [shape: f32[1,128], index: 7, kind: output, shape index: {}]
  %s8 = sld [smem:[#allocation0]]
  $region58: #{tpu_custom_call.1} parent=0
    _
  %s10 = ssub.s32 1, %s8
  %s11 = scalar_select 0, %s10, %s8
  $region1: #{tpu_custom_call.1} parent=0
    #allocation2 [shape = 'u8[512]{0}', space=smem, size = 0x200, scoped, tag = 'input window, operand 0, single buffered']
    #allocation3 [shape = 's32[1]{0}', space=sflag, size = 0x4, scoped, tag = 'scoped memory for tpu_custom_call.1']
    #allocation4 [shape = 's32[1]{0}', space=sflag, size = 0x4, scoped, tag = 'scoped memory for tpu_custom_call.1']
    #allocation5 [shape = 's32[1]{0}', space=sflag, size = 0x4, scoped, tag = 'scoped memory for tpu_custom_call.1']
    #allocation6 [shape = 's32[1]{0}', space=sflag, size = 0x4, scoped, tag = 'scoped memory for tpu_custom_call.1']
    #allocation7 [shape = 'u8[4096]{0}', space=smem, size = 0x1000, scoped, tag = 'input window, operand 1, single buffered']
    #allocation8 [shape = 's32[1]{0}', space=sflag, size = 0x4, scoped, tag = 'scoped memory for tpu_custom_call.1']
    #allocation9 [shape = 'u8[4096]{0}', space=smem, size = 0x1000, scoped, tag = 'input window, operand 2, single buffered']
    #allocation10 [shape = 'u8[16384]{0}', space=vmem, size = 0x4000, scoped, tag = 'input window, operand 3, single buffered']
    #allocation11 [shape = 'u8[16384]{0}', space=vmem, size = 0x4000, scoped, tag = 'input window, operand 4, single buffered']
    #allocation12 [shape = 's32[1]{0}', space=sflag, size = 0x4, scoped, tag = 'scoped memory for tpu_custom_call.1']
    #allocation13 [shape = 'u8[512]{0}', space=vmem, size = 0x400, scoped, tag = 'output window, operand 0, single buffered']
    %12 = vsyncpa [#allocation6], 0
    %13 = vsyncpa [#allocation8], 0
    %14 = vsyncpa [#allocation5], 0
    %15 = vsyncpa [#allocation3], 0
    %16 = vsyncpa [#allocation12], 0
    %17 = vsyncpa [#allocation4], 0
    // Predicated region
    $region2: #{tpu_custom_call.1} parent=1 // pred_check
      _
    $region3: #{tpu_custom_call.1} parent=1 // pred_check_branch
      %19 = sbr.rel (0) target = $region5
    $region4: #{tpu_custom_call.1} parent=1 // pred_region
      %s21 = ssub.s32 16, 16
      %22 = vsyncadd [#allocation6], %s21
      %s24 = sshll.u32 %s0, 4
      %s25 = int_to_ptr.vmem [resolvable:$true] %s24
      %27 = dma.vmem_to_smem %s25, 16, [#allocation2], [#allocation6]
    $region5: #{tpu_custom_call.1} parent=1 // pred_fallthru
      _
    // Predicated region
    $region6: #{tpu_custom_call.1} parent=1 // pred_check
      _
    $region7: #{tpu_custom_call.1} parent=1 // pred_check_branch
      %29 = sbr.rel (0) target = $region9
    $region8: #{tpu_custom_call.1} parent=1 // pred_region
      %s31 = ssub.s32 128, 128
      %32 = vsyncadd [#allocation8], %s31
      %s34 = sshll.u32 %s1, 4
      %s35 = int_to_ptr.vmem [resolvable:$true] %s34
      %37 = dma.vmem_to_smem %s35, 128, [#allocation7], [#allocation8]
    $region9: #{tpu_custom_call.1} parent=1 // pred_fallthru
      _
    // Predicated region
    $region10: #{tpu_custom_call.1} parent=1 // pred_check
      _
    $region11: #{tpu_custom_call.1} parent=1 // pred_check_branch
      %39 = sbr.rel (0) target = $region13
    $region12: #{tpu_custom_call.1} parent=1 // pred_region
      %s41 = ssub.s32 128, 128
      %42 = vsyncadd [#allocation5], %s41
      %45 = dma.hbm_to_smem %s2, 128, [#allocation9], [#allocation5]
    $region13: #{tpu_custom_call.1} parent=1 // pred_fallthru
      _
    // Predicated region
    $region14: #{tpu_custom_call.1} parent=1 // pred_check
      _
    $region15: #{tpu_custom_call.1} parent=1 // pred_check_branch
      %47 = sbr.rel (0) target = $region17
    $region16: #{tpu_custom_call.1} parent=1 // pred_region
      %s49 = ssub.s32 512, 512
      %50 = vsyncadd [#allocation3], %s49
      %s51 = sshll.u32 [#allocation10], 4
      %s52 = int_to_ptr.vmem [resolvable:$true] %s51
      %57 = dma.hbm_to_vmem [thread:$0]  %s3, 512, %s52, [#allocation3], 256, 256, 16
    $region17: #{tpu_custom_call.1} parent=1 // pred_fallthru
      _
    // Predicated region
    $region18: #{tpu_custom_call.1} parent=1 // pred_check
      _
    $region19: #{tpu_custom_call.1} parent=1 // pred_check_branch
      %59 = sbr.rel (0) target = $region21
    $region20: #{tpu_custom_call.1} parent=1 // pred_region
      %s61 = ssub.s32 512, 512
      %62 = vsyncadd [#allocation12], %s61
      %s63 = sshll.u32 [#allocation11], 4
      %s64 = int_to_ptr.vmem [resolvable:$true] %s63
      %69 = dma.hbm_to_vmem [thread:$0]  %s4, 512, %s64, [#allocation12], 256, 256, 16
    $region21: #{tpu_custom_call.1} parent=1 // pred_fallthru
      _
    // Predicated region
    $region22: #{tpu_custom_call.1} parent=1 // pred_check
      _
    $region23: #{tpu_custom_call.1} parent=1 // pred_check_branch
      %71 = sbr.rel (0) target = $region25
    $region24: #{tpu_custom_call.1} parent=1 // pred_region
      _
    $region25: #{tpu_custom_call.1} parent=1 // pred_fallthru
      _
    // Predicated region
    $region26: #{tpu_custom_call.1} parent=1 // pred_check
      _
    $region27: #{tpu_custom_call.1} parent=1 // pred_check_branch
      %73 = sbr.rel (0) target = $region29
    $region28: #{tpu_custom_call.1} parent=1 // pred_region
      _
    $region29: #{tpu_custom_call.1} parent=1 // pred_fallthru
      _
    // Predicated region
    $region30: #{tpu_custom_call.1} parent=1 // pred_check
      _
    $region31: #{tpu_custom_call.1} parent=1 // pred_check_branch
      %75 = sbr.rel (0) target = $region33
    $region32: #{tpu_custom_call.1} parent=1 // pred_region
      %76 = dma.done [#allocation6], 16
    $region33: #{tpu_custom_call.1} parent=1 // pred_fallthru
      _
    // Predicated region
    $region34: #{tpu_custom_call.1} parent=1 // pred_check
      _
    $region35: #{tpu_custom_call.1} parent=1 // pred_check_branch
      %78 = sbr.rel (0) target = $region37
    $region36: #{tpu_custom_call.1} parent=1 // pred_region
      %79 = dma.done [#allocation8], 128
    $region37: #{tpu_custom_call.1} parent=1 // pred_fallthru
      _
    // Predicated region
    $region38: #{tpu_custom_call.1} parent=1 // pred_check
      _
    $region39: #{tpu_custom_call.1} parent=1 // pred_check_branch
      %81 = sbr.rel (0) target = $region41
    $region40: #{tpu_custom_call.1} parent=1 // pred_region
      %82 = dma.done [#allocation5], 128
    $region41: #{tpu_custom_call.1} parent=1 // pred_fallthru
      _
    // Predicated region
    $region42: #{tpu_custom_call.1} parent=1 // pred_check
      _
    $region43: #{tpu_custom_call.1} parent=1 // pred_check_branch
      %84 = sbr.rel (0) target = $region45
    $region44: #{tpu_custom_call.1} parent=1 // pred_region
      %85 = dma.done [#allocation3], 512
    $region45: #{tpu_custom_call.1} parent=1 // pred_fallthru
      _
    // Predicated region
    $region46: #{tpu_custom_call.1} parent=1 // pred_check
      _
    $region47: #{tpu_custom_call.1} parent=1 // pred_check_branch
      %87 = sbr.rel (0) target = $region49
    $region48: #{tpu_custom_call.1} parent=1 // pred_region
      %88 = dma.done [#allocation12], 512
    $region49: #{tpu_custom_call.1} parent=1 // pred_fallthru
      _
    %89 = sfence
    %s90 = sld [smem:[#allocation2]]
    %s91 = sld [smem:[#allocation7 + %s90]]
    %s92 = sld [smem:[#allocation9 + %s90]]
    %v93 = vld [vmem:[#allocation10] sm:$0xff]
    %v94 = vld [vmem:[#allocation10 + $0x8] sm:$0xff]
    %v95 = vld [vmem:[#allocation11] sm:$0xff]
    %v96 = vld [vmem:[#allocation11 + $0x8] sm:$0xff]
    %v97 = vstv %s91
    %v98 = vmul.f32 %v97, %v93
    %v99 = vmul.f32 %v97, %v94
    %v100 = vstv %s92
    %v101 = vmul.f32 %v100, %v95
    %v102 = vmul.f32 %v100, %v96
    %v103 = vadd.f32 %v98, %v101
    %v104 = vadd.f32 %v99, %v102
    %v105 = vld [vmem:[%s5] sm:$0xff]
    %107 = vset.pattern.permute.xlu0 0
    %108 = vperm.xlu0 %107, %v105
    %v109 = vpop.permute.xlu0 %108
    %v111 = vld [vmem:[%s6] sm:$0xff]
    %113 = vset.pattern.permute.xlu0 0
    %114 = vperm.xlu0 %113, %v111
    %v115 = vpop.permute.xlu0 %114
    %v117 = vlaneseq
    %v118 = vshrl.u32 %v117, 7
    %v119 = vsub.s32 0, %v118
    %v120 = vrot.slane %v103, %v119
    %v121 = vlaneseq
    %v122 = vshrl.u32 %v121, 7
    %v123 = vsub.s32 0, %v122
    %v124 = vrot.slane %v104, %v123
    %v125 = vmul.f32 %v115, %v120
    %v126 = vmul.f32 %v115, %v124
    %v127 = vadd.f32 %v109, %v125
    %v128 = vadd.f32 %v109, %v126
    %129 = vset.pattern.permute.xlu0 1
    %130 = vperm.xlu0 %129, %v111
    %v131 = vpop.permute.xlu0 %130
    %v133 = vlaneseq
    %v134 = vshrl.u32 %v133, 7
    %v135 = vsub.s32 1, %v134
    %v136 = vrot.slane %v103, %v135
    %v137 = vlaneseq
    %v138 = vshrl.u32 %v137, 7
    %v139 = vsub.s32 1, %v138
    %v140 = vrot.slane %v104, %v139
    %v141 = vmul.f32 %v131, %v136
    %v142 = vmul.f32 %v131, %v140
    %v143 = vadd.f32 %v127, %v141
    %v144 = vadd.f32 %v128, %v142
    %145 = vset.pattern.permute.xlu0 2
    %146 = vperm.xlu0 %145, %v111
    %v147 = vpop.permute.xlu0 %146
    %v149 = vlaneseq
    %v150 = vshrl.u32 %v149, 7
    %v151 = vsub.s32 2, %v150
    %v152 = vrot.slane %v103, %v151
    %v153 = vlaneseq
    %v154 = vshrl.u32 %v153, 7
    %v155 = vsub.s32 2, %v154
    %v156 = vrot.slane %v104, %v155
    %v157 = vmul.f32 %v147, %v152
    %v158 = vmul.f32 %v147, %v156
    %v159 = vadd.f32 %v143, %v157
    %v160 = vadd.f32 %v144, %v158
    %161 = vset.pattern.permute.xlu0 3
    %162 = vperm.xlu0 %161, %v111
    %v163 = vpop.permute.xlu0 %162
    %v165 = vlaneseq
    %v166 = vshrl.u32 %v165, 7
    %v167 = vsub.s32 3, %v166
    %v168 = vrot.slane %v103, %v167
    %v169 = vlaneseq
    %v170 = vshrl.u32 %v169, 7
    %v171 = vsub.s32 3, %v170
    %v172 = vrot.slane %v104, %v171
    %v173 = vmul.f32 %v163, %v168
    %v174 = vmul.f32 %v163, %v172
    %v175 = vadd.f32 %v159, %v173
    %v176 = vadd.f32 %v160, %v174
    %177 = vset.pattern.permute.xlu0 4
    %178 = vperm.xlu0 %177, %v111
    %v179 = vpop.permute.xlu0 %178
    %v181 = vlaneseq
    %v182 = vshrl.u32 %v181, 7
    %v183 = vsub.s32 4, %v182
    %v184 = vrot.slane %v103, %v183
    %v185 = vlaneseq
    %v186 = vshrl.u32 %v185, 7
    %v187 = vsub.s32 4, %v186
    %v188 = vrot.slane %v104, %v187
    %v189 = vmul.f32 %v179, %v184
    %v190 = vmul.f32 %v179, %v188
    %v191 = vadd.f32 %v175, %v189
    %v192 = vadd.f32 %v176, %v190
    %193 = vset.pattern.permute.xlu0 5
    %194 = vperm.xlu0 %193, %v111
    %v195 = vpop.permute.xlu0 %194
    %v197 = vlaneseq
    %v198 = vshrl.u32 %v197, 7
    %v199 = vsub.s32 5, %v198
    %v200 = vrot.slane %v103, %v199
    %v201 = vlaneseq
    %v202 = vshrl.u32 %v201, 7
    %v203 = vsub.s32 5, %v202
    %v204 = vrot.slane %v104, %v203
    %v205 = vmul.f32 %v195, %v200
    %v206 = vmul.f32 %v195, %v204
    %v207 = vadd.f32 %v191, %v205
    %v208 = vadd.f32 %v192, %v206
    %209 = vset.pattern.permute.xlu0 6
    %210 = vperm.xlu0 %209, %v111
    %v211 = vpop.permute.xlu0 %210
    %v213 = vlaneseq
    %v214 = vshrl.u32 %v213, 7
    %v215 = vsub.s32 6, %v214
    %v216 = vrot.slane %v103, %v215
    %v217 = vlaneseq
    %v218 = vshrl.u32 %v217, 7
    %v219 = vsub.s32 6, %v218
    %v220 = vrot.slane %v104, %v219
    %v221 = vmul.f32 %v211, %v216
    %v222 = vmul.f32 %v211, %v220
    %v223 = vadd.f32 %v207, %v221
    %v224 = vadd.f32 %v208, %v222
    %225 = vset.pattern.permute.xlu0 7
    %226 = vperm.xlu0 %225, %v111
    %v227 = vpop.permute.xlu0 %226
    %v229 = vlaneseq
    %v230 = vshrl.u32 %v229, 7
    %v231 = vsub.s32 7, %v230
    %v232 = vrot.slane %v103, %v231
    %v233 = vlaneseq
    %v234 = vshrl.u32 %v233, 7
    %v235 = vsub.s32 7, %v234
    %v236 = vrot.slane %v104, %v235
    %v237 = vmul.f32 %v227, %v232
    %v238 = vmul.f32 %v227, %v236
    %v239 = vadd.f32 %v223, %v237
    %v240 = vadd.f32 %v224, %v238
    %v241 = vsub.f32 %v239, %v95
    %v242 = vsub.f32 %v240, %v96
    %v243 = vand.u32 2147483647, %v241
    %v244 = vand.u32 2147483647, %v242
    %v245 = vadd.f32 %v243, %v244
    %246 = vadd.xlane.f32.xlu0 %v245
    %v247 = vpop.xlane.xlu0 %246
    %v248 = vrot.slane %v247, 4
    %v249 = vadd.f32 %v247, %v248
    %v250 = vrot.slane %v249, 2
    %v251 = vadd.f32 %v249, %v250
    %v252 = vrot.slane %v251, 1
    %v253 = vadd.f32 %v251, %v252
    %s254 = vtos %v253
    %s255 = sadd.f32 %s254, 0.0
    %s256 = sld [smem:[#allocation2 + $0x1]]
    %s257 = sld [smem:[#allocation7 + %s256]]
    %s258 = sld [smem:[#allocation9 + %s256]]
    %v259 = vld [vmem:[#allocation10 + $0x10] sm:$0xff]
    %v260 = vld [vmem:[#allocation10 + $0x18] sm:$0xff]
    %v261 = vld [vmem:[#allocation11 + $0x10] sm:$0xff]
    %v262 = vld [vmem:[#allocation11 + $0x18] sm:$0xff]
    %v263 = vstv %s257
    %v264 = vmul.f32 %v263, %v259
    %v265 = vmul.f32 %v263, %v260
    %v266 = vstv %s258
    %v267 = vmul.f32 %v266, %v261
    %v268 = vmul.f32 %v266, %v262
    %v269 = vadd.f32 %v264, %v267
    %v270 = vadd.f32 %v265, %v268
    %271 = vset.pattern.permute.xlu0 1
    %272 = vperm.xlu0 %271, %v105
    %v273 = vpop.permute.xlu0 %272
    %v275 = vlaneseq
    %v276 = vshrl.u32 %v275, 7
    %v277 = vsub.s32 0, %v276
    %v278 = vrot.slane %v269, %v277
    %v279 = vlaneseq
    %v280 = vshrl.u32 %v279, 7
    %v281 = vsub.s32 0, %v280
    %v282 = vrot.slane %v270, %v281
    %v283 = vmul.f32 %v115, %v278
    %v284 = vmul.f32 %v115, %v282
    %v285 = vadd.f32 %v273, %v283
    %v286 = vadd.f32 %v273, %v284
    %v287 = vlaneseq
    %v288 = vshrl.u32 %v287, 7
    %v289 = vsub.s32 1, %v288
    %v290 = vrot.slane %v269, %v289
    %v291 = vlaneseq
    %v292 = vshrl.u32 %v291, 7
    %v293 = vsub.s32 1, %v292
    %v294 = vrot.slane %v270, %v293
    %v295 = vmul.f32 %v131, %v290
    %v296 = vmul.f32 %v131, %v294
    %v297 = vadd.f32 %v285, %v295
    %v298 = vadd.f32 %v286, %v296
    %v299 = vlaneseq
    %v300 = vshrl.u32 %v299, 7
    %v301 = vsub.s32 2, %v300
    %v302 = vrot.slane %v269, %v301
    %v303 = vlaneseq
    %v304 = vshrl.u32 %v303, 7
    %v305 = vsub.s32 2, %v304
    %v306 = vrot.slane %v270, %v305
    %v307 = vmul.f32 %v147, %v302
    %v308 = vmul.f32 %v147, %v306
    %v309 = vadd.f32 %v297, %v307
    %v310 = vadd.f32 %v298, %v308
    %v311 = vlaneseq
    %v312 = vshrl.u32 %v311, 7
    %v313 = vsub.s32 3, %v312
    %v314 = vrot.slane %v269, %v313
    %v315 = vlaneseq
    %v316 = vshrl.u32 %v315, 7
    %v317 = vsub.s32 3, %v316
    %v318 = vrot.slane %v270, %v317
    %v319 = vmul.f32 %v163, %v314
    %v320 = vmul.f32 %v163, %v318
    %v321 = vadd.f32 %v309, %v319
    %v322 = vadd.f32 %v310, %v320
    %v323 = vlaneseq
    %v324 = vshrl.u32 %v323, 7
    %v325 = vsub.s32 4, %v324
    %v326 = vrot.slane %v269, %v325
    %v327 = vlaneseq
    %v328 = vshrl.u32 %v327, 7
    %v329 = vsub.s32 4, %v328
    %v330 = vrot.slane %v270, %v329
    %v331 = vmul.f32 %v179, %v326
    %v332 = vmul.f32 %v179, %v330
    %v333 = vadd.f32 %v321, %v331
    %v334 = vadd.f32 %v322, %v332
    %v335 = vlaneseq
    %v336 = vshrl.u32 %v335, 7
    %v337 = vsub.s32 5, %v336
    %v338 = vrot.slane %v269, %v337
    %v339 = vlaneseq
    %v340 = vshrl.u32 %v339, 7
    %v341 = vsub.s32 5, %v340
    %v342 = vrot.slane %v270, %v341
    %v343 = vmul.f32 %v195, %v338
    %v344 = vmul.f32 %v195, %v342
    %v345 = vadd.f32 %v333, %v343
    %v346 = vadd.f32 %v334, %v344
    %v347 = vlaneseq
    %v348 = vshrl.u32 %v347, 7
    %v349 = vsub.s32 6, %v348
    %v350 = vrot.slane %v269, %v349
    %v351 = vlaneseq
    %v352 = vshrl.u32 %v351, 7
    %v353 = vsub.s32 6, %v352
    %v354 = vrot.slane %v270, %v353
    %v355 = vmul.f32 %v211, %v350
    %v356 = vmul.f32 %v211, %v354
    %v357 = vadd.f32 %v345, %v355
    %v358 = vadd.f32 %v346, %v356
    %v359 = vlaneseq
    %v360 = vshrl.u32 %v359, 7
    %v361 = vsub.s32 7, %v360
    %v362 = vrot.slane %v269, %v361
    %v363 = vlaneseq
    %v364 = vshrl.u32 %v363, 7
    %v365 = vsub.s32 7, %v364
    %v366 = vrot.slane %v270, %v365
    %v367 = vmul.f32 %v227, %v362
    %v368 = vmul.f32 %v227, %v366
    %v369 = vadd.f32 %v357, %v367
    %v370 = vadd.f32 %v358, %v368
    %v371 = vsub.f32 %v369, %v261
    %v372 = vsub.f32 %v370, %v262
    %v373 = vand.u32 2147483647, %v371
    %v374 = vand.u32 2147483647, %v372
    %v375 = vadd.f32 %v373, %v374
    %376 = vadd.xlane.f32.xlu0 %v375
    %v377 = vpop.xlane.xlu0 %376
    %v378 = vrot.slane %v377, 4
    %v379 = vadd.f32 %v377, %v378
    %v380 = vrot.slane %v379, 2
    %v381 = vadd.f32 %v379, %v380
    %v382 = vrot.slane %v381, 1
    %v383 = vadd.f32 %v381, %v382
    %s384 = vtos %v383
    %s385 = sadd.f32 %s255, %s384
    %s386 = smul.f32 %s385, 0.00024414063
    %v387 = vstv %s386
    %388 = vst [vmem:[#allocation13] sm:$0x1] %v387
    // Predicated region
    $region50: #{tpu_custom_call.1} parent=1 // pred_check
      _
    $region51: #{tpu_custom_call.1} parent=1 // pred_check_branch
      %390 = sbr.rel (0) target = $region53
    $region52: #{tpu_custom_call.1} parent=1 // pred_region
      %s392 = ssub.s32 16, 16
      %393 = vsyncadd [#allocation4], %s392
      %s395 = sshll.u32 [#allocation13], 4
      %s396 = int_to_ptr.vmem [resolvable:$true] %s395
      %398 = dma.vmem_to_hbm [thread:$0]  %s396, 16, %s7, [#allocation4]
    $region53: #{tpu_custom_call.1} parent=1 // pred_fallthru
      _
    // Predicated region
    $region54: #{tpu_custom_call.1} parent=1 // pred_check
      _
    $region55: #{tpu_custom_call.1} parent=1 // pred_check_branch
      %400 = sbr.rel (0) target = $region57
    $region56: #{tpu_custom_call.1} parent=1 // pred_region
      %401 = dma.done [#allocation4], 16
    $region57: #{tpu_custom_call.1} parent=1 // pred_fallthru
      _
    %402 = vsyncpa [#allocation3], 1
    %403 = vsyncpa [#allocation12], 1
    %404 = vsyncpa [#allocation4], 1
    %405 = vsyncpa [#allocation5], 1
    %406 = vsyncpa [#allocation6], 1
    %407 = vsyncpa [#allocation8], 1

</llo_original>
